<compile_context>
chip_gen: v7x
topology: tpu7x:2x2x1
jax: 0.10.0
libtpu: 0.0.40
codegen_flags: <defaults>
</compile_context>

<pallas_src>
import functools

import jax
import jax.numpy as jnp
from jax.experimental import pallas as pl
from jax.experimental.pallas import tpu as pltpu


NUM_EMOTIONS = 7
LANES = 128            # vreg lane width
OUT_PAD = 128          # lane-dense padded output width
MAX_TILE_B = 2048      # per-grid-step batch tile cap (VMEM-safe on v5e/v6e/v7x)


def _round_up(x, m):
    return ((x + m - 1) // m) * m


def _sigmoid(x):
    # Exact logistic: exp on the EUP, exact f32 divide.  For very negative x,
    # exp(-x) -> inf and 1/(1+inf) cleanly gives 0 (no NaN), so no clamping
    # is needed and the gates carry no approximation error.
    return 1.0 / (1.0 + jnp.exp(-x))


# ----------------------------------------------------------------------------
# Kernel
# ----------------------------------------------------------------------------
def attention_fusion_kernel(
    facial_ref,           # [TB, Df]   facial feature tile (streamed)
    audio_ref,            # [TB, Da]   audio  feature tile (streamed)
    w1f_ref,              # [Df, 4G]   facial half of packed first layer
    w1a_ref,              # [Da, 4G]   audio  half of packed first layer
    b1_ref,               # [1, 4G]    packed first-layer bias
    aux_ref,              # [4, G]     rows: fa_w2 | aa_w2 | fu_b1 | [fa_b2, aa_b2, 0...]
    w2_ref,               # [G, 128]   fusion L2 weight (K padded H->G, N padded 7->128)
    b2_ref,               # [1, 128]   fusion L2 bias (padded)
    o_ref,                # [TB, 128]  bf16 output block
    *,
    group,
):
    G = group
    xf = facial_ref[...].astype(jnp.float32)
    xa = audio_ref[...].astype(jnp.float32)

    # Packed first layer: two accumulating MXU matmuls (replaces torch.cat +
    # four separate linears).  Column groups, each 128-lane aligned:
    #   [ fa_w1 | fu_w1_facial | aa_w1 | fu_w1_audio ]
    # b1 packs [ fa_b1 | 0 | aa_b1 | 0 ] so the fusion partials stay bias-free
    # (the fusion bias must not be scaled by the gates).
    y = jnp.dot(xf, w1f_ref[...], preferred_element_type=jnp.float32)
    y = y + jnp.dot(xa, w1a_ref[...], preferred_element_type=jnp.float32)
    y = y + b1_ref[...]

    fh    = jnp.maximum(y[:, 0 * G:1 * G], 0.0)   # relu(facial @ fa_w1 + fa_b1)
    fus_f = y[:, 1 * G:2 * G]                     # facial @ fu_w1[:Df]   (bias-free)
    ah    = jnp.maximum(y[:, 2 * G:3 * G], 0.0)   # relu(audio  @ aa_w1 + aa_b1)
    fus_a = y[:, 3 * G:4 * G]                     # audio  @ fu_w1[Df:]   (bias-free)

    aux = aux_ref[...]
    fa_w2 = aux[0:1, :]          # [1, G]
    aa_w2 = aux[1:2, :]          # [1, G]
    fu_b1 = aux[2:3, :]          # [1, G]
    fa_b2 = aux[3:4, 0:1]        # [1, 1]
    aa_b2 = aux[3:4, 1:2]        # [1, 1]

    # Attention second layers (output width 1): VPU multiply + XLU lane
    # reduction instead of an MXU pass with a single useful lane.
    f_gate = _sigmoid(jnp.sum(fh * fa_w2, axis=-1, keepdims=True) + fa_b2)  # [TB, 1]
    a_gate = _sigmoid(jnp.sum(ah * aa_w2, axis=-1, keepdims=True) + aa_b2)  # [TB, 1]

    # Fusion MLP using (gate * x) @ W == gate * (x @ W)  (gate is per-row scalar).
    h = jnp.maximum(f_gate * fus_f + a_gate * fus_a + fu_b1, 0.0)
    # Dropout(p=0.3) -> identity in eval/inference mode.
    logits = jnp.dot(h, w2_ref[...], preferred_element_type=jnp.float32) + b2_ref[...]

    o_ref[...] = logits.astype(o_ref.dtype)


# ----------------------------------------------------------------------------
# Wrapper
# ----------------------------------------------------------------------------
def _choose_tile_b(B, max_tile_b=MAX_TILE_B):
    """Batch tile: multiple of 16 (bf16 output sublane tiling), capped so that
    the grid has >= 2 steps whenever possible (v7x dual-TensorCore sharding)."""
    Bp = _round_up(max(B, 1), 16)
    tb = min(_round_up(max_tile_b, 16), Bp)
    if Bp >= 32:
        tb = min(tb, _round_up(pl.cdiv(Bp, 2), 16))
    return tb


def attention_fusion(facial, audio, kp, *, max_tile_b=MAX_TILE_B):
    """facial: [B, Df], audio: [B, Da] -> logits [B, 7] f32."""
    B, Df = facial.shape
    Da = audio.shape[1]
    G = kp["G"]

    facial = facial.astype(jnp.float32)
    audio = audio.astype(jnp.float32)

    tb = _choose_tile_b(B, max_tile_b)
    Bp = _round_up(B, tb)
    if Bp != B:
        facial = jnp.pad(facial, ((0, Bp - B), (0, 0)))
        audio = jnp.pad(audio, ((0, Bp - B), (0, 0)))

    const = lambda i: (0, 0)   # weights/biases: same block every step (VMEM-resident)

    out = pl.pallas_call(
        functools.partial(attention_fusion_kernel, group=G),
        out_shape=jax.ShapeDtypeStruct((Bp, OUT_PAD), jnp.bfloat16),
        grid_spec=pltpu.PrefetchScalarGridSpec(
            num_scalar_prefetch=0,
            grid=(Bp // tb,),
            in_specs=[
                pl.BlockSpec((tb, Df), lambda i: (i, 0)),   # facial (streamed)
                pl.BlockSpec((tb, Da), lambda i: (i, 0)),   # audio  (streamed)
                pl.BlockSpec(kp["w1f"].shape, const),
                pl.BlockSpec(kp["w1a"].shape, const),
                pl.BlockSpec(kp["b1"].shape, const),
                pl.BlockSpec(kp["aux"].shape, const),
                pl.BlockSpec(kp["w2"].shape, const),
                pl.BlockSpec(kp["b2"].shape, const),
            ],
            out_specs=pl.BlockSpec((tb, OUT_PAD), lambda i: (i, 0)),
        ),
        compiler_params=pltpu.CompilerParams(
            dimension_semantics=("parallel",),   # shard batch across TCs on v7x
        ),
    )(
        facial, audio,
        kp["w1f"], kp["w1a"], kp["b1"], kp["aux"], kp["w2"], kp["b2"],
    )

    return out[:B, :NUM_EMOTIONS].astype(jnp.float32)


# ----------------------------------------------------------------------------
# Parameters: PyTorch-style init + packing for the kernel layout
# ----------------------------------------------------------------------------
def _linear_params(key, fan_in, fan_out):
    bound = 1.0 / jnp.sqrt(fan_in)
    kw, kb = jax.random.split(key)
    w = jax.random.uniform(kw, (fan_in, fan_out), jnp.float32, -bound, bound)
    b = jax.random.uniform(kb, (1, fan_out), jnp.float32, -bound, bound)
    return w, b


def init_raw_params(key, facial_dim, audio_dim, hidden_dim):
    """Weights stored [in_features, out_features] (x @ W + b convention)."""
    keys = jax.random.split(key, 6)
    fa_w1, fa_b1 = _linear_params(keys[0], facial_dim, hidden_dim)
    fa_w2, fa_b2 = _linear_params(keys[1], hidden_dim, 1)
    aa_w1, aa_b1 = _linear_params(keys[2], audio_dim, hidden_dim)
    aa_w2, aa_b2 = _linear_params(keys[3], hidden_dim, 1)
    fu_w1, fu_b1 = _linear_params(keys[4], facial_dim + audio_dim, hidden_dim)
    fu_w2, fu_b2 = _linear_params(keys[5], hidden_dim, NUM_EMOTIONS)
    return {
        "fa_w1": fa_w1, "fa_b1": fa_b1, "fa_w2": fa_w2, "fa_b2": fa_b2,
        "aa_w1": aa_w1, "aa_b1": aa_b1, "aa_w2": aa_w2, "aa_b2": aa_b2,
        "fu_w1": fu_w1, "fu_b1": fu_b1, "fu_w2": fu_w2, "fu_b2": fu_b2,
    }


def pack_params(rp, facial_dim, audio_dim):
    """Build the packed / 128-lane-aligned weight layout consumed by the kernel."""
    Df, H = rp["fa_w1"].shape
    Da = rp["aa_w1"].shape[0]
    assert Df == facial_dim and Da == audio_dim
    G = _round_up(H, LANES)   # lane-aligned group width

    # facial half of the packed first layer: [Df, 4G]
    w1f = jnp.zeros((Df, 4 * G), jnp.float32)
    w1f = w1f.at[:, 0 * G:0 * G + H].set(rp["fa_w1"])
    w1f = w1f.at[:, 1 * G:1 * G + H].set(rp["fu_w1"][:Df])

    # audio half of the packed first layer: [Da, 4G]
    w1a = jnp.zeros((Da, 4 * G), jnp.float32)
    w1a = w1a.at[:, 2 * G:2 * G + H].set(rp["aa_w1"])
    w1a = w1a.at[:, 3 * G:3 * G + H].set(rp["fu_w1"][Df:])

    # packed first-layer bias: [ fa_b1 | 0 | aa_b1 | 0 ]
    b1 = jnp.zeros((1, 4 * G), jnp.float32)
    b1 = b1.at[:, 0 * G:0 * G + H].set(rp["fa_b1"])
    b1 = b1.at[:, 2 * G:2 * G + H].set(rp["aa_b1"])

    # consolidated aux weights: rows = fa_w2 | aa_w2 | fu_b1 | [fa_b2, aa_b2]
    aux = jnp.zeros((4, G), jnp.float32)
    aux = aux.at[0, :H].set(rp["fa_w2"][:, 0])
    aux = aux.at[1, :H].set(rp["aa_w2"][:, 0])
    aux = aux.at[2, :H].set(rp["fu_b1"][0])
    aux = aux.at[3, 0].set(rp["fa_b2"][0, 0])
    aux = aux.at[3, 1].set(rp["aa_b2"][0, 0])

    # lane-dense output weights: K padded H->G, N padded 7->128
    w2 = jnp.zeros((G, OUT_PAD), jnp.float32).at[:H, :NUM_EMOTIONS].set(rp["fu_w2"])
    b2 = jnp.zeros((1, OUT_PAD), jnp.float32).at[:, :NUM_EMOTIONS].set(rp["fu_b2"])

    return {"w1f": w1f, "w1a": w1a, "b1": b1, "aux": aux, "w2": w2, "b2": b2, "G": G}


# ----------------------------------------------------------------------------
# Pure-JAX reference (mirrors the torch module forward, eval mode)
# ----------------------------------------------------------------------------
def reference(facial, audio, rp):
    fg = jax.nn.sigmoid(
        jnp.maximum(facial @ rp["fa_w1"] + rp["fa_b1"], 0.0) @ rp["fa_w2"] + rp["fa_b2"]
    )
    ag = jax.nn.sigmoid(
        jnp.maximum(audio @ rp["aa_w1"] + rp["aa_b1"], 0.0) @ rp["aa_w2"] + rp["aa_b2"]
    )
    combined = jnp.concatenate([facial * fg, audio * ag], axis=1)
    h = jnp.maximum(combined @ rp["fu_w1"] + rp["fu_b1"], 0.0)
    return h @ rp["fu_w2"] + rp["fu_b2"]


# ----------------------------------------------------------------------------
if __name__ == "__main__":
    B, FACIAL_DIM, AUDIO_DIM, HIDDEN_DIM = 16, 32, 16, 32

    key = jax.random.PRNGKey(0)
    k_f, k_a, k_p = jax.random.split(key, 3)
    facial = jax.random.normal(k_f, (B, FACIAL_DIM), jnp.float32)
    audio = jax.random.normal(k_a, (B, AUDIO_DIM), jnp.float32)

    raw = init_raw_params(k_p, FACIAL_DIM, AUDIO_DIM, HIDDEN_DIM)
    kp = pack_params(raw, FACIAL_DIM, AUDIO_DIM)

    out = attention_fusion(facial, audio, kp)
    out = jax.block_until_ready(out)

    ref = reference(facial, audio, raw)
    assert out.shape == (B, NUM_EMOTIONS)
    # Tolerance covers the bf16 rounding of the output store (gates and all
    # matmul accumulation are exact f32).
    assert jnp.allclose(out, ref, atol=2e-2, rtol=2e-2), "kernel/reference mismatch"

    print("KERNEL_OK")
</pallas_src>

<mosaic_0001>
module attributes {stable_mosaic.version = 11 : i64} {
  func.func @attention_fusion_kernel(%arg0: i32, %arg1: memref<16x32xf32, #tpu.memory_space<vmem>>, %arg2: memref<16x16xf32, #tpu.memory_space<vmem>>, %arg3: memref<32x512xf32, #tpu.memory_space<vmem>>, %arg4: memref<16x512xf32, #tpu.memory_space<vmem>>, %arg5: memref<1x512xf32, #tpu.memory_space<vmem>>, %arg6: memref<4x128xf32, #tpu.memory_space<vmem>>, %arg7: memref<128x128xf32, #tpu.memory_space<vmem>>, %arg8: memref<1x128xf32, #tpu.memory_space<vmem>>, %arg9: memref<16x128xbf16, #tpu.memory_space<vmem>>) attributes {dimension_semantics = [#tpu.dimension_semantics<parallel>], iteration_bounds = array<i64: 1>, scalar_prefetch = 0 : i64, scratch_operands = 0 : i64, tpu.core_type = #tpu.core_type<tc>, window_params = [{transform_indices = @transform_0, window_bounds = array<i64: 16, 32>}, {transform_indices = @transform_1, window_bounds = array<i64: 16, 16>}, {pipeline_mode = #tpu.pipeline_mode<synchronous>, transform_indices = @transform_2, window_bounds = array<i64: 32, 512>}, {pipeline_mode = #tpu.pipeline_mode<synchronous>, transform_indices = @transform_3, window_bounds = array<i64: 16, 512>}, {pipeline_mode = #tpu.pipeline_mode<synchronous>, transform_indices = @transform_4, window_bounds = array<i64: 1, 512>}, {pipeline_mode = #tpu.pipeline_mode<synchronous>, transform_indices = @transform_5, window_bounds = array<i64: 4, 128>}, {pipeline_mode = #tpu.pipeline_mode<synchronous>, transform_indices = @transform_6, window_bounds = array<i64: 128, 128>}, {pipeline_mode = #tpu.pipeline_mode<synchronous>, transform_indices = @transform_7, window_bounds = array<i64: 1, 128>}, {transform_indices = @transform_8, window_bounds = array<i64: 16, 128>}]} {
    %c0 = arith.constant 0 : index
    %c0_0 = arith.constant 0 : index
    %0 = vector.load %arg1[%c0, %c0_0] : memref<16x32xf32, #tpu.memory_space<vmem>>, vector<16x32xf32>
    %c0_1 = arith.constant 0 : index
    %c0_2 = arith.constant 0 : index
    %1 = vector.load %arg2[%c0_1, %c0_2] : memref<16x16xf32, #tpu.memory_space<vmem>>, vector<16x16xf32>
    %c0_3 = arith.constant 0 : index
    %c0_4 = arith.constant 0 : index
    %2 = vector.load %arg3[%c0_3, %c0_4] : memref<32x512xf32, #tpu.memory_space<vmem>>, vector<32x512xf32>
    %cst = arith.constant dense<0.000000e+00> : vector<16x512xf32>
    %3 = tpu.matmul %0, %2, %cst {dimension_numbers = #tpu.dot_dimension_numbers<[1], [0], [0], [1], [0, 0, 1, 1], [], []>} : vector<16x32xf32>, vector<32x512xf32>, vector<16x512xf32> -> vector<16x512xf32>
    %c0_5 = arith.constant 0 : index
    %c0_6 = arith.constant 0 : index
    %4 = vector.load %arg4[%c0_5, %c0_6] : memref<16x512xf32, #tpu.memory_space<vmem>>, vector<16x512xf32>
    %cst_7 = arith.constant dense<0.000000e+00> : vector<16x512xf32>
    %5 = tpu.matmul %1, %4, %cst_7 {dimension_numbers = #tpu.dot_dimension_numbers<[1], [0], [0], [1], [0, 0, 1, 1], [], []>} : vector<16x16xf32>, vector<16x512xf32>, vector<16x512xf32> -> vector<16x512xf32>
    %6 = arith.addf %3, %5 : vector<16x512xf32>
    %c0_8 = arith.constant 0 : index
    %c0_9 = arith.constant 0 : index
    %7 = vector.load %arg5[%c0_8, %c0_9] : memref<1x512xf32, #tpu.memory_space<vmem>>, vector<1x512xf32>
    %8 = vector.broadcast %7 : vector<1x512xf32> to vector<16x512xf32>
    %9 = arith.addf %6, %8 : vector<16x512xf32>
    %10 = vector.extract_strided_slice %9 {offsets = [0, 0], sizes = [16, 128], strides = [1, 1]} : vector<16x512xf32> to vector<16x128xf32>
    %cst_10 = arith.constant 0.000000e+00 : f32
    %11 = vector.broadcast %cst_10 : f32 to vector<16x128xf32>
    %12 = arith.maximumf %10, %11 : vector<16x128xf32>
    %13 = vector.extract_strided_slice %9 {offsets = [0, 128], sizes = [16, 128], strides = [1, 1]} : vector<16x512xf32> to vector<16x128xf32>
    %14 = vector.extract_strided_slice %9 {offsets = [0, 256], sizes = [16, 128], strides = [1, 1]} : vector<16x512xf32> to vector<16x128xf32>
    %cst_11 = arith.constant 0.000000e+00 : f32
    %15 = vector.broadcast %cst_11 : f32 to vector<16x128xf32>
    %16 = arith.maximumf %14, %15 : vector<16x128xf32>
    %17 = vector.extract_strided_slice %9 {offsets = [0, 384], sizes = [16, 128], strides = [1, 1]} : vector<16x512xf32> to vector<16x128xf32>
    %c0_12 = arith.constant 0 : index
    %c0_13 = arith.constant 0 : index
    %18 = vector.load %arg6[%c0_12, %c0_13] : memref<4x128xf32, #tpu.memory_space<vmem>>, vector<4x128xf32>
    %19 = vector.extract_strided_slice %18 {offsets = [0, 0], sizes = [1, 128], strides = [1, 1]} : vector<4x128xf32> to vector<1x128xf32>
    %20 = vector.extract_strided_slice %18 {offsets = [1, 0], sizes = [1, 128], strides = [1, 1]} : vector<4x128xf32> to vector<1x128xf32>
    %21 = vector.extract_strided_slice %18 {offsets = [2, 0], sizes = [1, 128], strides = [1, 1]} : vector<4x128xf32> to vector<1x128xf32>
    %22 = vector.extract_strided_slice %18 {offsets = [3, 0], sizes = [1, 1], strides = [1, 1]} : vector<4x128xf32> to vector<1x1xf32>
    %23 = vector.extract_strided_slice %18 {offsets = [3, 1], sizes = [1, 1], strides = [1, 1]} : vector<4x128xf32> to vector<1x1xf32>
    %24 = vector.broadcast %19 : vector<1x128xf32> to vector<16x128xf32>
    %25 = arith.mulf %12, %24 : vector<16x128xf32>
    %cst_14 = arith.constant dense<0.000000e+00> : vector<16xf32>
    %26 = vector.multi_reduction <add>, %25, %cst_14 [1] : vector<16x128xf32> to vector<16xf32>
    %27 = vector.shape_cast %26 : vector<16xf32> to vector<16x1xf32>
    %28 = vector.broadcast %22 : vector<1x1xf32> to vector<16x1xf32>
    %29 = arith.addf %27, %28 : vector<16x1xf32>
    %cst_15 = arith.constant 0.000000e+00 : f32
    %30 = vector.broadcast %cst_15 : f32 to vector<16x1xf32>
    %31 = arith.subf %30, %29 : vector<16x1xf32>
    %32 = math.exp %31 : vector<16x1xf32>
    %cst_16 = arith.constant 1.000000e+00 : f32
    %33 = vector.broadcast %cst_16 : f32 to vector<16x1xf32>
    %34 = arith.addf %33, %32 : vector<16x1xf32>
    %cst_17 = arith.constant 1.000000e+00 : f32
    %35 = vector.broadcast %cst_17 : f32 to vector<16x1xf32>
    %36 = arith.divf %35, %34 : vector<16x1xf32>
    %37 = vector.broadcast %20 : vector<1x128xf32> to vector<16x128xf32>
    %38 = arith.mulf %16, %37 : vector<16x128xf32>
    %cst_18 = arith.constant dense<0.000000e+00> : vector<16xf32>
    %39 = vector.multi_reduction <add>, %38, %cst_18 [1] : vector<16x128xf32> to vector<16xf32>
    %40 = vector.shape_cast %39 : vector<16xf32> to vector<16x1xf32>
    %41 = vector.broadcast %23 : vector<1x1xf32> to vector<16x1xf32>
    %42 = arith.addf %40, %41 : vector<16x1xf32>
    %cst_19 = arith.constant 0.000000e+00 : f32
    %43 = vector.broadcast %cst_19 : f32 to vector<16x1xf32>
    %44 = arith.subf %43, %42 : vector<16x1xf32>
    %45 = math.exp %44 : vector<16x1xf32>
    %cst_20 = arith.constant 1.000000e+00 : f32
    %46 = vector.broadcast %cst_20 : f32 to vector<16x1xf32>
    %47 = arith.addf %46, %45 : vector<16x1xf32>
    %cst_21 = arith.constant 1.000000e+00 : f32
    %48 = vector.broadcast %cst_21 : f32 to vector<16x1xf32>
    %49 = arith.divf %48, %47 : vector<16x1xf32>
    %50 = vector.broadcast %36 : vector<16x1xf32> to vector<16x128xf32>
    %51 = arith.mulf %50, %13 : vector<16x128xf32>
    %52 = vector.broadcast %49 : vector<16x1xf32> to vector<16x128xf32>
    %53 = arith.mulf %52, %17 : vector<16x128xf32>
    %54 = arith.addf %51, %53 : vector<16x128xf32>
    %55 = vector.broadcast %21 : vector<1x128xf32> to vector<16x128xf32>
    %56 = arith.addf %54, %55 : vector<16x128xf32>
    %cst_22 = arith.constant 0.000000e+00 : f32
    %57 = vector.broadcast %cst_22 : f32 to vector<16x128xf32>
    %58 = arith.maximumf %56, %57 : vector<16x128xf32>
    %c0_23 = arith.constant 0 : index
    %c0_24 = arith.constant 0 : index
    %59 = vector.load %arg7[%c0_23, %c0_24] : memref<128x128xf32, #tpu.memory_space<vmem>>, vector<128x128xf32>
    %cst_25 = arith.constant dense<0.000000e+00> : vector<16x128xf32>
    %60 = tpu.matmul %58, %59, %cst_25 {dimension_numbers = #tpu.dot_dimension_numbers<[1], [0], [0], [1], [0, 0, 1, 1], [], []>} : vector<16x128xf32>, vector<128x128xf32>, vector<16x128xf32> -> vector<16x128xf32>
    %c0_26 = arith.constant 0 : index
    %c0_27 = arith.constant 0 : index
    %61 = vector.load %arg8[%c0_26, %c0_27] : memref<1x128xf32, #tpu.memory_space<vmem>>, vector<1x128xf32>
    %62 = vector.broadcast %61 : vector<1x128xf32> to vector<16x128xf32>
    %63 = arith.addf %60, %62 : vector<16x128xf32>
    %64 = arith.truncf %63 : vector<16x128xf32> to vector<16x128xbf16>
    %c0_28 = arith.constant 0 : index
    %c0_29 = arith.constant 0 : index
    %65 = vector.load %arg9[%c0_28, %c0_29] : memref<16x128xbf16, #tpu.memory_space<vmem>>, vector<16x128xbf16>
    tpu.vector_store %arg9[%c0_28, %c0_29], %64 {strides = array<i32>} : memref<16x128xbf16, #tpu.memory_space<vmem>>, vector<16x128xbf16>,
    return
  }
  func.func @transform_0(%arg0: i32) -> (i32, i32) {
    %c0_i32 = arith.constant 0 : i32
    %c0_i32_0 = arith.constant 0 : i32
    return %arg0, %c0_i32 : i32, i32
  }
  func.func @transform_1(%arg0: i32) -> (i32, i32) {
    %c0_i32 = arith.constant 0 : i32
    %c0_i32_0 = arith.constant 0 : i32
    return %arg0, %c0_i32 : i32, i32
  }
  func.func @transform_2(%arg0: i32) -> (i32, i32) {
    %c0_i32 = arith.constant 0 : i32
    %c0_i32_0 = arith.constant 0 : i32
    %c0_i32_1 = arith.constant 0 : i32
    return %c0_i32, %c0_i32_0 : i32, i32
  }
  func.func @transform_3(%arg0: i32) -> (i32, i32) {
    %c0_i32 = arith.constant 0 : i32
    %c0_i32_0 = arith.constant 0 : i32
    %c0_i32_1 = arith.constant 0 : i32
    return %c0_i32, %c0_i32_0 : i32, i32
  }
  func.func @transform_4(%arg0: i32) -> (i32, i32) {
    %c0_i32 = arith.constant 0 : i32
    %c0_i32_0 = arith.constant 0 : i32
    %c0_i32_1 = arith.constant 0 : i32
    return %c0_i32, %c0_i32_0 : i32, i32
  }
  func.func @transform_5(%arg0: i32) -> (i32, i32) {
    %c0_i32 = arith.constant 0 : i32
    %c0_i32_0 = arith.constant 0 : i32
    %c0_i32_1 = arith.constant 0 : i32
    return %c0_i32, %c0_i32_0 : i32, i32
  }
  func.func @transform_6(%arg0: i32) -> (i32, i32) {
    %c0_i32 = arith.constant 0 : i32
    %c0_i32_0 = arith.constant 0 : i32
    %c0_i32_1 = arith.constant 0 : i32
    return %c0_i32, %c0_i32_0 : i32, i32
  }
  func.func @transform_7(%arg0: i32) -> (i32, i32) {
    %c0_i32 = arith.constant 0 : i32
    %c0_i32_0 = arith.constant 0 : i32
    %c0_i32_1 = arith.constant 0 : i32
    return %c0_i32, %c0_i32_0 : i32, i32
  }
  func.func @transform_8(%arg0: i32) -> (i32, i32) {
    %c0_i32 = arith.constant 0 : i32
    %c0_i32_0 = arith.constant 0 : i32
    return %arg0, %c0_i32 : i32, i32
  }
}

</mosaic_0001>

<llo_original>
// kernel: tpu_custom_call.1
$region0: #{tpu_custom_call.1}
  #allocation0 [shape = 'u32[]', space=smem, size = 0x4, offset = 0x4, fixed_abs, tag = 'smem constant byte address 0x4 - core index']
  #allocation1 [shape = 'u32[144,128]{1,0:T(1,128)}', space=vmem, size = 0x12000, scoped, tag = 'internal scratch']
  %s0 = inlined_call_operand.hbm [shape: f32[16,32], index: 0, kind: input, shape index: {}]
  %s1 = inlined_call_operand.hbm [shape: f32[16,16], index: 1, kind: input, shape index: {}]
  %s2 = inlined_call_operand.hbm [shape: f32[32,512], index: 2, kind: input, shape index: {}]
  %s3 = inlined_call_operand.hbm [shape: f32[16,512], index: 3, kind: input, shape index: {}]
  %s4 = inlined_call_operand.vmem [shape: f32[1,512], index: 4, kind: input, shape index: {}]
  %s5 = inlined_call_operand.vmem [shape: f32[4,128], index: 5, kind: input, shape index: {}]
  %s6 = inlined_call_operand.hbm [shape: f32[128,128], index: 6, kind: input, shape index: {}]
  %s7 = inlined_call_operand.vmem [shape: f32[1,128], index: 7, kind: input, shape index: {}]
  %s8 = inlined_call_operand.hbm [shape: bf16[16,128], index: 8, kind: output, shape index: {}]
  %s9 = sld [smem:[#allocation0]]
  $region62: #{tpu_custom_call.1} parent=0
    _
  %s11 = ssub.s32 1, %s9
  %s12 = scalar_select 0, %s11, %s9
  $region1: #{tpu_custom_call.1} parent=0
    #allocation2 [shape = 'u8[8192]{0}', space=vmem, size = 0x2000, scoped, tag = 'input window, operand 0, single buffered']
    #allocation3 [shape = 's32[1]{0}', space=sflag, size = 0x4, scoped, tag = 'scoped memory for tpu_custom_call.1']
    #allocation4 [shape = 's32[1]{0}', space=sflag, size = 0x4, scoped, tag = 'scoped memory for tpu_custom_call.1']
    #allocation5 [shape = 'u8[8192]{0}', space=vmem, size = 0x2000, scoped, tag = 'input window, operand 1, single buffered']
    #allocation6 [shape = 's32[1]{0}', space=sflag, size = 0x4, scoped, tag = 'scoped memory for tpu_custom_call.1']
    #allocation7 [shape = 'u8[65536]{0}', space=vmem, size = 0x10000, scoped, tag = 'input window, operand 2, single buffered']
    #allocation8 [shape = 'u8[32768]{0}', space=vmem, size = 0x8000, scoped, tag = 'input window, operand 3, single buffered']
    #allocation9 [shape = 's32[1]{0}', space=sflag, size = 0x4, scoped, tag = 'scoped memory for tpu_custom_call.1']
    #allocation10 [shape = 'u8[65536]{0}', space=vmem, size = 0x10000, scoped, tag = 'input window, operand 6, single buffered']
    #allocation11 [shape = 'u8[4096]{0}', space=vmem, size = 0x1000, scoped, tag = 'output window, operand 0, single buffered']
    %13 = vsyncpa [#allocation3], 0
    %14 = vsyncpa [#allocation6], 0
    %15 = vsyncpa [#allocation9], 0
    %16 = vsyncpa [#allocation4], 0
    // Predicated region
    $region2: #{tpu_custom_call.1} parent=1 // pred_check
      _
    $region3: #{tpu_custom_call.1} parent=1 // pred_check_branch
      %18 = sbr.rel (0) target = $region5
    $region4: #{tpu_custom_call.1} parent=1 // pred_region
      %s20 = ssub.s32 256, 256
      %21 = vsyncadd [#allocation3], %s20
      %s22 = sshll.u32 [#allocation2], 4
      %s23 = int_to_ptr.vmem [resolvable:$true] %s22
      %28 = dma.hbm_to_vmem [thread:$0]  %s0, 256, %s23, [#allocation3], 128, 128, 8
    $region5: #{tpu_custom_call.1} parent=1 // pred_fallthru
      _
    // Predicated region
    $region6: #{tpu_custom_call.1} parent=1 // pred_check
      _
    $region7: #{tpu_custom_call.1} parent=1 // pred_check_branch
      %30 = sbr.rel (0) target = $region9
    $region8: #{tpu_custom_call.1} parent=1 // pred_region
      %s32 = ssub.s32 256, 256
      %33 = vsyncadd [#allocation6], %s32
      %s34 = sshll.u32 [#allocation5], 4
      %s35 = int_to_ptr.vmem [resolvable:$true] %s34
      %40 = dma.hbm_to_vmem [thread:$0]  %s1, 256, %s35, [#allocation6], 128, 128, 8
    $region9: #{tpu_custom_call.1} parent=1 // pred_fallthru
      _
    // Predicated region
    $region10: #{tpu_custom_call.1} parent=1 // pred_check
      _
    $region11: #{tpu_custom_call.1} parent=1 // pred_check_branch
      %42 = sbr.rel (0) target = $region13
    $region12: #{tpu_custom_call.1} parent=1 // pred_region
      %s44 = ssub.s32 2048, 2048
      %45 = vsyncadd [#allocation6], %s44
      %s46 = sshll.u32 [#allocation7], 4
      %s47 = int_to_ptr.vmem [resolvable:$true] %s46
      %52 = dma.hbm_to_vmem [thread:$0]  %s2, 2048, %s47, [#allocation6], 512, 512, 32
    $region13: #{tpu_custom_call.1} parent=1 // pred_fallthru
      _
    // Predicated region
    $region14: #{tpu_custom_call.1} parent=1 // pred_check
      _
    $region15: #{tpu_custom_call.1} parent=1 // pred_check_branch
      %54 = sbr.rel (0) target = $region17
    $region16: #{tpu_custom_call.1} parent=1 // pred_region
      %s56 = ssub.s32 1024, 1024
      %57 = vsyncadd [#allocation9], %s56
      %s58 = sshll.u32 [#allocation8], 4
      %s59 = int_to_ptr.vmem [resolvable:$true] %s58
      %64 = dma.hbm_to_vmem [thread:$0]  %s3, 1024, %s59, [#allocation9], 512, 512, 32
    $region17: #{tpu_custom_call.1} parent=1 // pred_fallthru
      _
    // Predicated region
    $region18: #{tpu_custom_call.1} parent=1 // pred_check
      _
    $region19: #{tpu_custom_call.1} parent=1 // pred_check_branch
      %66 = sbr.rel (0) target = $region21
    $region20: #{tpu_custom_call.1} parent=1 // pred_region
      _
    $region21: #{tpu_custom_call.1} parent=1 // pred_fallthru
      _
    // Predicated region
    $region22: #{tpu_custom_call.1} parent=1 // pred_check
      _
    $region23: #{tpu_custom_call.1} parent=1 // pred_check_branch
      %68 = sbr.rel (0) target = $region25
    $region24: #{tpu_custom_call.1} parent=1 // pred_region
      _
    $region25: #{tpu_custom_call.1} parent=1 // pred_fallthru
      _
    // Predicated region
    $region26: #{tpu_custom_call.1} parent=1 // pred_check
      _
    $region27: #{tpu_custom_call.1} parent=1 // pred_check_branch
      %70 = sbr.rel (0) target = $region29
    $region28: #{tpu_custom_call.1} parent=1 // pred_region
      %s72 = ssub.s32 2048, 2048
      %73 = vsyncadd [#allocation9], %s72
      %s74 = sshll.u32 [#allocation10], 4
      %s75 = int_to_ptr.vmem [resolvable:$true] %s74
      %80 = dma.hbm_to_vmem [thread:$0]  %s6, 2048, %s75, [#allocation9], 128, 128, 8
    $region29: #{tpu_custom_call.1} parent=1 // pred_fallthru
      _
    // Predicated region
    $region30: #{tpu_custom_call.1} parent=1 // pred_check
      _
    $region31: #{tpu_custom_call.1} parent=1 // pred_check_branch
      %82 = sbr.rel (0) target = $region33
    $region32: #{tpu_custom_call.1} parent=1 // pred_region
      _
    $region33: #{tpu_custom_call.1} parent=1 // pred_fallthru
      _
    // Predicated region
    $region34: #{tpu_custom_call.1} parent=1 // pred_check
      _
    $region35: #{tpu_custom_call.1} parent=1 // pred_check_branch
      %84 = sbr.rel (0) target = $region37
    $region36: #{tpu_custom_call.1} parent=1 // pred_region
      %85 = dma.done [#allocation3], 256
    $region37: #{tpu_custom_call.1} parent=1 // pred_fallthru
      _
    // Predicated region
    $region38: #{tpu_custom_call.1} parent=1 // pred_check
      _
    $region39: #{tpu_custom_call.1} parent=1 // pred_check_branch
      %87 = sbr.rel (0) target = $region41
    $region40: #{tpu_custom_call.1} parent=1 // pred_region
      %88 = dma.done [#allocation6], 256
    $region41: #{tpu_custom_call.1} parent=1 // pred_fallthru
      _
    // Predicated region
    $region42: #{tpu_custom_call.1} parent=1 // pred_check
      _
    $region43: #{tpu_custom_call.1} parent=1 // pred_check_branch
      %90 = sbr.rel (0) target = $region45
    $region44: #{tpu_custom_call.1} parent=1 // pred_region
      %91 = dma.done [#allocation6], 2048
    $region45: #{tpu_custom_call.1} parent=1 // pred_fallthru
      _
    // Predicated region
    $region46: #{tpu_custom_call.1} parent=1 // pred_check
      _
    $region47: #{tpu_custom_call.1} parent=1 // pred_check_branch
      %93 = sbr.rel (0) target = $region49
    $region48: #{tpu_custom_call.1} parent=1 // pred_region
      %94 = dma.done [#allocation9], 1024
    $region49: #{tpu_custom_call.1} parent=1 // pred_fallthru
      _
    // Predicated region
    $region50: #{tpu_custom_call.1} parent=1 // pred_check
      _
    $region51: #{tpu_custom_call.1} parent=1 // pred_check_branch
      %96 = sbr.rel (0) target = $region53
    $region52: #{tpu_custom_call.1} parent=1 // pred_region
      %97 = dma.done [#allocation9], 2048
    $region53: #{tpu_custom_call.1} parent=1 // pred_fallthru
      _
    %v98 = vld [vmem:[#allocation2] sm:$0xff]
    %v99 = vld [vmem:[#allocation2 + $0x8] sm:$0xff]
    %v100 = vld [vmem:[#allocation5] sm:$0xff]
    %v101 = vld [vmem:[#allocation5 + $0x8] sm:$0xff]
    %v102 = vld [vmem:[#allocation7] sm:$0xff]
    %v103 = vld [vmem:[#allocation7 + $0x8] sm:$0xff]
    %v104 = vld [vmem:[#allocation7 + $0x10] sm:$0xff]
    %v105 = vld [vmem:[#allocation7 + $0x18] sm:$0xff]
    %v106 = vld [vmem:[#allocation7 + $0x20] sm:$0xff]
    %v107 = vld [vmem:[#allocation7 + $0x28] sm:$0xff]
    %v108 = vld [vmem:[#allocation7 + $0x30] sm:$0xff]
    %v109 = vld [vmem:[#allocation7 + $0x38] sm:$0xff]
    %v110 = vld [vmem:[#allocation7 + $0x40] sm:$0xff]
    %v111 = vld [vmem:[#allocation7 + $0x48] sm:$0xff]
    %v112 = vld [vmem:[#allocation7 + $0x50] sm:$0xff]
    %v113 = vld [vmem:[#allocation7 + $0x58] sm:$0xff]
    %v114 = vld [vmem:[#allocation7 + $0x60] sm:$0xff]
    %v115 = vld [vmem:[#allocation7 + $0x68] sm:$0xff]
    %v116 = vld [vmem:[#allocation7 + $0x70] sm:$0xff]
    %v117 = vld [vmem:[#allocation7 + $0x78] sm:$0xff]
    %v118 = vld [vmem:[#allocation8] sm:$0xff]
    %v119 = vld [vmem:[#allocation8 + $0x8] sm:$0xff]
    %v120 = vld [vmem:[#allocation8 + $0x10] sm:$0xff]
    %v121 = vld [vmem:[#allocation8 + $0x18] sm:$0xff]
    %v122 = vld [vmem:[#allocation8 + $0x20] sm:$0xff]
    %v123 = vld [vmem:[#allocation8 + $0x28] sm:$0xff]
    %v124 = vld [vmem:[#allocation8 + $0x30] sm:$0xff]
    %v125 = vld [vmem:[#allocation8 + $0x38] sm:$0xff]
    %vm126 = vcmask 130048
    %v128 = vsel %vm126, %v100, 0
    %v131 = vsel %vm126, %v101, 0
    %133 = vmatprep.subr.mxu0 %v119
    %134 = vmatpush1.msra.mxu0 %v118
    %135 = vmatprep.subr.mxu0 %v123
    %136 = vmatpush1.msra.mxu0 %v122
    %137 = vmatprep.subr.mxu0 0.0
    %138 = vmatpush1.msra.mxu0 0.0
    %139 = vmatprep.subr.mxu0 0.0
    %140 = vmatpush1.msra.mxu0 0.0
    %141 = vmatprep.subr.mxu0 0.0
    %142 = vmatpush1.msra.mxu0 0.0
    %143 = vmatprep.subr.mxu0 0.0
    %144 = vmatpush1.msra.mxu0 0.0
    %145 = vmatprep.subr.mxu0 0.0
    %146 = vmatpush1.msra.mxu0 0.0
    %147 = vmatprep.subr.mxu0 0.0
    %148 = vmatpush1.msra.mxu0 0.0
    %149 = vmatprep.subr.mxu0 0.0
    %150 = vmatpush1.msra.mxu0 0.0
    %151 = vmatprep.subr.mxu0 0.0
    %152 = vmatpush1.msra.mxu0 0.0
    %153 = vmatprep.subr.mxu0 0.0
    %154 = vmatpush1.msra.mxu0 0.0
    %155 = vmatprep.subr.mxu0 0.0
    %156 = vmatpush1.msra.mxu0 0.0
    %157 = vmatprep.subr.mxu0 0.0
    %158 = vmatpush1.msra.mxu0 0.0
    %159 = vmatprep.subr.mxu0 0.0
    %160 = vmatpush1.msra.mxu0 0.0
    %161 = vmatprep.subr.mxu0 0.0
    %162 = vmatpush1.msra.mxu0 0.0
    %163 = vmatprep.subr.mxu0 0.0
    %164 = vmatpush1.msra.mxu0 0.0
    %165 = vmatprep.subr.mxu0 0.0
    %166 = vmatpush1.msra.mxu0 0.0
    %167 = vmatprep.subr.mxu0 0.0
    %168 = vmatpush1.msra.mxu0 0.0
    %169 = vmatprep.subr.mxu0 0.0
    %170 = vmatpush1.msra.mxu0 0.0
    %171 = vmatprep.subr.mxu0 0.0
    %172 = vmatpush1.msra.mxu0 0.0
    %173 = vmatprep.subr.mxu0 0.0
    %174 = vmatpush1.msra.mxu0 0.0
    %175 = vmatprep.subr.mxu0 0.0
    %176 = vmatpush1.msra.mxu0 0.0
    %177 = vmatprep.subr.mxu0 0.0
    %178 = vmatpush1.msra.mxu0 0.0
    %179 = vmatprep.subr.mxu0 0.0
    %180 = vmatpush1.msra.mxu0 0.0
    %181 = vmatprep.subr.mxu0 0.0
    %182 = vmatpush1.msra.mxu0 0.0
    %183 = vmatprep.subr.mxu0 0.0
    %184 = vmatpush1.msra.mxu0 0.0
    %185 = vmatprep.subr.mxu0 0.0
    %186 = vmatpush1.msra.mxu0 0.0
    %187 = vmatprep.subr.mxu0 0.0
    %188 = vmatpush1.msra.mxu0 0.0
    %189 = vmatprep.subr.mxu0 0.0
    %190 = vmatpush1.msra.mxu0 0.0
    %191 = vmatprep.subr.mxu0 0.0
    %192 = vmatpush1.msra.mxu0 0.0
    %193 = vmatprep.subr.mxu0 0.0
    %194 = vmatpush1.msra.mxu0 0.0
    %195 = vmatprep.subr.mxu0 0.0
    %196 = vmatpush1.msra.mxu0 0.0
    %197 = vmatprep.mubr.f32.mxu0 0.0
    %198 = vmatmul.mubr.f32.gmra.mrb[0].mxu0 %v128
    %v199 = vpop.f32.mrb[0].mxu0
    %v200 = vadd.f32 0.0, %v199
    %v201 = vpop.f32.mrb[0].mxu0
    %v202 = vadd.f32 0.0, %v201
    %203 = vmatprep.mubr.f32.mxu0 0.0
    %204 = vmatmul.mubr.f32.gmra.mrb[0].mxu0 %v131
    %v205 = vpop.f32.mrb[0].mxu0
    %v206 = vadd.f32 0.0, %v205
    %v207 = vpop.f32.mrb[0].mxu0
    %v208 = vadd.f32 0.0, %v207
    %209 = vdwg.mxu0
    %210 = vmatprep.subr.mxu0 %v121
    %211 = vmatpush1.msra.mxu0 %v120
    %212 = vmatprep.subr.mxu0 %v125
    %213 = vmatpush1.msra.mxu0 %v124
    %214 = vmatprep.subr.mxu0 0.0
    %215 = vmatpush1.msra.mxu0 0.0
    %216 = vmatprep.subr.mxu0 0.0
    %217 = vmatpush1.msra.mxu0 0.0
    %218 = vmatprep.subr.mxu0 0.0
    %219 = vmatpush1.msra.mxu0 0.0
    %220 = vmatprep.subr.mxu0 0.0
    %221 = vmatpush1.msra.mxu0 0.0
    %222 = vmatprep.subr.mxu0 0.0
    %223 = vmatpush1.msra.mxu0 0.0
    %224 = vmatprep.subr.mxu0 0.0
    %225 = vmatpush1.msra.mxu0 0.0
    %226 = vmatprep.subr.mxu0 0.0
    %227 = vmatpush1.msra.mxu0 0.0
    %228 = vmatprep.subr.mxu0 0.0
    %229 = vmatpush1.msra.mxu0 0.0
    %230 = vmatprep.subr.mxu0 0.0
    %231 = vmatpush1.msra.mxu0 0.0
    %232 = vmatprep.subr.mxu0 0.0
    %233 = vmatpush1.msra.mxu0 0.0
    %234 = vmatprep.subr.mxu0 0.0
    %235 = vmatpush1.msra.mxu0 0.0
    %236 = vmatprep.subr.mxu0 0.0
    %237 = vmatpush1.msra.mxu0 0.0
    %238 = vmatprep.subr.mxu0 0.0
    %239 = vmatpush1.msra.mxu0 0.0
    %240 = vmatprep.subr.mxu0 0.0
    %241 = vmatpush1.msra.mxu0 0.0
    %242 = vmatprep.subr.mxu0 0.0
    %243 = vmatpush1.msra.mxu0 0.0
    %244 = vmatprep.subr.mxu0 0.0
    %245 = vmatpush1.msra.mxu0 0.0
    %246 = vmatprep.subr.mxu0 0.0
    %247 = vmatpush1.msra.mxu0 0.0
    %248 = vmatprep.subr.mxu0 0.0
    %249 = vmatpush1.msra.mxu0 0.0
    %250 = vmatprep.subr.mxu0 0.0
    %251 = vmatpush1.msra.mxu0 0.0
    %252 = vmatprep.subr.mxu0 0.0
    %253 = vmatpush1.msra.mxu0 0.0
    %254 = vmatprep.subr.mxu0 0.0
    %255 = vmatpush1.msra.mxu0 0.0
    %256 = vmatprep.subr.mxu0 0.0
    %257 = vmatpush1.msra.mxu0 0.0
    %258 = vmatprep.subr.mxu0 0.0
    %259 = vmatpush1.msra.mxu0 0.0
    %260 = vmatprep.subr.mxu0 0.0
    %261 = vmatpush1.msra.mxu0 0.0
    %262 = vmatprep.subr.mxu0 0.0
    %263 = vmatpush1.msra.mxu0 0.0
    %264 = vmatprep.subr.mxu0 0.0
    %265 = vmatpush1.msra.mxu0 0.0
    %266 = vmatprep.subr.mxu0 0.0
    %267 = vmatpush1.msra.mxu0 0.0
    %268 = vmatprep.subr.mxu0 0.0
    %269 = vmatpush1.msra.mxu0 0.0
    %270 = vmatprep.subr.mxu0 0.0
    %271 = vmatpush1.msra.mxu0 0.0
    %272 = vmatprep.subr.mxu0 0.0
    %273 = vmatpush1.msra.mxu0 0.0
    %274 = vmatprep.mubr.f32.mxu0 0.0
    %275 = vmatmul.mubr.f32.gmra.mrb[0].mxu0 %v128
    %v276 = vpop.f32.mrb[0].mxu0
    %v277 = vadd.f32 0.0, %v276
    %v278 = vpop.f32.mrb[0].mxu0
    %v279 = vadd.f32 0.0, %v278
    %280 = vmatprep.mubr.f32.mxu0 0.0
    %281 = vmatmul.mubr.f32.gmra.mrb[0].mxu0 %v131
    %v282 = vpop.f32.mrb[0].mxu0
    %v283 = vadd.f32 0.0, %v282
    %v284 = vpop.f32.mrb[0].mxu0
    %v285 = vadd.f32 0.0, %v284
    %286 = vdwg.mxu0
    %vm287 = vcmask 261120
    %v289 = vsel %vm287, %v98, 0
    %v292 = vsel %vm287, %v99, 0
    %294 = vmatprep.subr.mxu0 %v103
    %295 = vmatpush1.msra.mxu0 %v102
    %296 = vmatprep.subr.mxu0 %v107
    %297 = vmatpush1.msra.mxu0 %v106
    %298 = vmatprep.subr.mxu0 %v111
    %299 = vmatpush1.msra.mxu0 %v110
    %300 = vmatprep.subr.mxu0 %v115
    %301 = vmatpush1.msra.mxu0 %v114
    %302 = vmatprep.subr.mxu0 0.0
    %303 = vmatpush1.msra.mxu0 0.0
    %304 = vmatprep.subr.mxu0 0.0
    %305 = vmatpush1.msra.mxu0 0.0
    %306 = vmatprep.subr.mxu0 0.0
    %307 = vmatpush1.msra.mxu0 0.0
    %308 = vmatprep.subr.mxu0 0.0
    %309 = vmatpush1.msra.mxu0 0.0
    %310 = vmatprep.subr.mxu0 0.0
    %311 = vmatpush1.msra.mxu0 0.0
    %312 = vmatprep.subr.mxu0 0.0
    %313 = vmatpush1.msra.mxu0 0.0
    %314 = vmatprep.subr.mxu0 0.0
    %315 = vmatpush1.msra.mxu0 0.0
    %316 = vmatprep.subr.mxu0 0.0
    %317 = vmatpush1.msra.mxu0 0.0
    %318 = vmatprep.subr.mxu0 0.0
    %319 = vmatpush1.msra.mxu0 0.0
    %320 = vmatprep.subr.mxu0 0.0
    %321 = vmatpush1.msra.mxu0 0.0
    %322 = vmatprep.subr.mxu0 0.0
    %323 = vmatpush1.msra.mxu0 0.0
    %324 = vmatprep.subr.mxu0 0.0
    %325 = vmatpush1.msra.mxu0 0.0
    %326 = vmatprep.subr.mxu0 0.0
    %327 = vmatpush1.msra.mxu0 0.0
    %328 = vmatprep.subr.mxu0 0.0
    %329 = vmatpush1.msra.mxu0 0.0
    %330 = vmatprep.subr.mxu0 0.0
    %331 = vmatpush1.msra.mxu0 0.0
    %332 = vmatprep.subr.mxu0 0.0
    %333 = vmatpush1.msra.mxu0 0.0
    %334 = vmatprep.subr.mxu0 0.0
    %335 = vmatpush1.msra.mxu0 0.0
    %336 = vmatprep.subr.mxu0 0.0
    %337 = vmatpush1.msra.mxu0 0.0
    %338 = vmatprep.subr.mxu0 0.0
    %339 = vmatpush1.msra.mxu0 0.0
    %340 = vmatprep.subr.mxu0 0.0
    %341 = vmatpush1.msra.mxu0 0.0
    %342 = vmatprep.subr.mxu0 0.0
    %343 = vmatpush1.msra.mxu0 0.0
    %344 = vmatprep.subr.mxu0 0.0
    %345 = vmatpush1.msra.mxu0 0.0
    %346 = vmatprep.subr.mxu0 0.0
    %347 = vmatpush1.msra.mxu0 0.0
    %348 = vmatprep.subr.mxu0 0.0
    %349 = vmatpush1.msra.mxu0 0.0
    %350 = vmatprep.subr.mxu0 0.0
    %351 = vmatpush1.msra.mxu0 0.0
    %352 = vmatprep.subr.mxu0 0.0
    %353 = vmatpush1.msra.mxu0 0.0
    %354 = vmatprep.subr.mxu0 0.0
    %355 = vmatpush1.msra.mxu0 0.0
    %356 = vmatprep.subr.mxu0 0.0
    %357 = vmatpush1.msra.mxu0 0.0
    %358 = vmatprep.mubr.f32.mxu0 0.0
    %359 = vmatmul.mubr.f32.gmra.mrb[0].mxu0 %v289
    %v360 = vpop.f32.mrb[0].mxu0
    %v361 = vadd.f32 %v200, %v360
    %v362 = vpop.f32.mrb[0].mxu0
    %v363 = vadd.f32 %v202, %v362
    %364 = vmatprep.mubr.f32.mxu0 0.0
    %365 = vmatmul.mubr.f32.gmra.mrb[0].mxu0 %v292
    %v366 = vpop.f32.mrb[0].mxu0
    %v367 = vadd.f32 %v206, %v366
    %v368 = vpop.f32.mrb[0].mxu0
    %v369 = vadd.f32 %v208, %v368
    %370 = vdwg.mxu0
    %371 = vmatprep.subr.mxu0 %v105
    %372 = vmatpush1.msra.mxu0 %v104
    %373 = vmatprep.subr.mxu0 %v109
    %374 = vmatpush1.msra.mxu0 %v108
    %375 = vmatprep.subr.mxu0 %v113
    %376 = vmatpush1.msra.mxu0 %v112
    %377 = vmatprep.subr.mxu0 %v117
    %378 = vmatpush1.msra.mxu0 %v116
    %379 = vmatprep.subr.mxu0 0.0
    %380 = vmatpush1.msra.mxu0 0.0
    %381 = vmatprep.subr.mxu0 0.0
    %382 = vmatpush1.msra.mxu0 0.0
    %383 = vmatprep.subr.mxu0 0.0
    %384 = vmatpush1.msra.mxu0 0.0
    %385 = vmatprep.subr.mxu0 0.0
    %386 = vmatpush1.msra.mxu0 0.0
    %387 = vmatprep.subr.mxu0 0.0
    %388 = vmatpush1.msra.mxu0 0.0
    %389 = vmatprep.subr.mxu0 0.0
    %390 = vmatpush1.msra.mxu0 0.0
    %391 = vmatprep.subr.mxu0 0.0
    %392 = vmatpush1.msra.mxu0 0.0
    %393 = vmatprep.subr.mxu0 0.0
    %394 = vmatpush1.msra.mxu0 0.0
    %395 = vmatprep.subr.mxu0 0.0
    %396 = vmatpush1.msra.mxu0 0.0
    %397 = vmatprep.subr.mxu0 0.0
    %398 = vmatpush1.msra.mxu0 0.0
    %399 = vmatprep.subr.mxu0 0.0
    %400 = vmatpush1.msra.mxu0 0.0
    %401 = vmatprep.subr.mxu0 0.0
    %402 = vmatpush1.msra.mxu0 0.0
    %403 = vmatprep.subr.mxu0 0.0
    %404 = vmatpush1.msra.mxu0 0.0
    %405 = vmatprep.subr.mxu0 0.0
    %406 = vmatpush1.msra.mxu0 0.0
    %407 = vmatprep.subr.mxu0 0.0
    %408 = vmatpush1.msra.mxu0 0.0
    %409 = vmatprep.subr.mxu0 0.0
    %410 = vmatpush1.msra.mxu0 0.0
    %411 = vmatprep.subr.mxu0 0.0
    %412 = vmatpush1.msra.mxu0 0.0
    %413 = vmatprep.subr.mxu0 0.0
    %414 = vmatpush1.msra.mxu0 0.0
    %415 = vmatprep.subr.mxu0 0.0
    %416 = vmatpush1.msra.mxu0 0.0
    %417 = vmatprep.subr.mxu0 0.0
    %418 = vmatpush1.msra.mxu0 0.0
    %419 = vmatprep.subr.mxu0 0.0
    %420 = vmatpush1.msra.mxu0 0.0
    %421 = vmatprep.subr.mxu0 0.0
    %422 = vmatpush1.msra.mxu0 0.0
    %423 = vmatprep.subr.mxu0 0.0
    %424 = vmatpush1.msra.mxu0 0.0
    %425 = vmatprep.subr.mxu0 0.0
    %426 = vmatpush1.msra.mxu0 0.0
    %427 = vmatprep.subr.mxu0 0.0
    %428 = vmatpush1.msra.mxu0 0.0
    %429 = vmatprep.subr.mxu0 0.0
    %430 = vmatpush1.msra.mxu0 0.0
    %431 = vmatprep.subr.mxu0 0.0
    %432 = vmatpush1.msra.mxu0 0.0
    %433 = vmatprep.subr.mxu0 0.0
    %434 = vmatpush1.msra.mxu0 0.0
    %435 = vmatprep.mubr.f32.mxu0 0.0
    %436 = vmatmul.mubr.f32.gmra.mrb[0].mxu0 %v289
    %v437 = vpop.f32.mrb[0].mxu0
    %v438 = vadd.f32 %v277, %v437
    %v439 = vpop.f32.mrb[0].mxu0
    %v440 = vadd.f32 %v279, %v439
    %441 = vmatprep.mubr.f32.mxu0 0.0
    %442 = vmatmul.mubr.f32.gmra.mrb[0].mxu0 %v292
    %v443 = vpop.f32.mrb[0].mxu0
    %v444 = vadd.f32 %v283, %v443
    %v445 = vpop.f32.mrb[0].mxu0
    %v446 = vadd.f32 %v285, %v445
    %447 = vdwg.mxu0
    %v448 = vld [vmem:[%s4] sm:$0xf]
    %v450 = vlaneseq
    %v451 = vshrl.u32 %v450, 7
    %v452 = vsub.s32 0, %v451
    %v453 = vrot.slane %v448, %v452
    %v454 = vlaneseq
    %v455 = vshrl.u32 %v454, 7
    %v456 = vsub.s32 1, %v455
    %v457 = vrot.slane %v448, %v456
    %v458 = vlaneseq
    %v459 = vshrl.u32 %v458, 7
    %v460 = vsub.s32 2, %v459
    %v461 = vrot.slane %v448, %v460
    %v462 = vlaneseq
    %v463 = vshrl.u32 %v462, 7
    %v464 = vsub.s32 3, %v463
    %v465 = vrot.slane %v448, %v464
    %v470 = vadd.f32 %v361, %v453
    %v471 = vadd.f32 %v363, %v457
    %v472 = vadd.f32 %v438, %v461
    %v473 = vadd.f32 %v440, %v465
    %v474 = vadd.f32 %v367, %v453
    %v475 = vadd.f32 %v369, %v457
    %v476 = vadd.f32 %v444, %v461
    %v477 = vadd.f32 %v446, %v465
    %v478 = vmax.f32 %v470, 0.0
    %v479 = vmax.f32 %v474, 0.0
    %v480 = vmax.f32 %v472, 0.0
    %v481 = vmax.f32 %v476, 0.0
    %v482 = vld [vmem:[%s5] sm:$0xf]
    %v483 = vlaneseq
    %v484 = vshrl.u32 %v483, 7
    %v485 = vsub.s32 0, %v484
    %v486 = vrot.slane %v482, %v485
    %v487 = vmul.f32 %v478, %v486
    %v488 = vmul.f32 %v479, %v486
    %489 = vadd.xlane.f32.xlu0 %v487
    %v490 = vpop.xlane.xlu0 %489
    %491 = vadd.xlane.f32.xlu0 %v488
    %v492 = vpop.xlane.xlu0 %491
    %v493 = vlaneseq
    %v494 = vshrl.u32 %v493, 7
    %v495 = vsub.s32 3, %v494
    %v496 = vrot.slane %v482, %v495
    %v497 = vadd.f32 %v490, %v496
    %v498 = vadd.f32 %v492, %v496
    %v499 = vsub.f32 0.0, %v497
    %v500 = vsub.f32 0.0, %v498
    %v501 = vmul.f32 %v499, 1.442695
    %v502 = vpow.pop %v501
    %v503 = vmul.f32 %v500, 1.442695
    %v504 = vpow.pop %v503
    %v505 = vadd.f32 %v502, 1.0
    %v506 = vadd.f32 %v504, 1.0
    %v507 = vrcp.pop %v505
    %v508 = vmul.f32 1.0, %v507
    %v509 = vrcp.pop %v506
    %v510 = vmul.f32 1.0, %v509
    %v511 = vlaneseq
    %v512 = vshrl.u32 %v511, 7
    %v513 = vsub.s32 1, %v512
    %v514 = vrot.slane %v482, %v513
    %v515 = vmul.f32 %v480, %v514
    %v516 = vmul.f32 %v481, %v514
    %517 = vadd.xlane.f32.xlu0 %v515
    %v518 = vpop.xlane.xlu0 %517
    %519 = vadd.xlane.f32.xlu0 %v516
    %v520 = vpop.xlane.xlu0 %519
    %v521 = vadd.f32 %v518, %v496
    %v522 = vadd.f32 %v520, %v496
    %v523 = vsub.f32 0.0, %v521
    %v524 = vsub.f32 0.0, %v522
    %v525 = vmul.f32 %v523, 1.442695
    %v526 = vpow.pop %v525
    %v527 = vmul.f32 %v524, 1.442695
    %v528 = vpow.pop %v527
    %v529 = vadd.f32 %v526, 1.0
    %v530 = vadd.f32 %v528, 1.0
    %v531 = vrcp.pop %v529
    %v532 = vmul.f32 1.0, %v531
    %v533 = vrcp.pop %v530
    %v534 = vmul.f32 1.0, %v533
    %536 = vset.pattern.permute.xlu0 0
    %537 = vperm.xlu0 %536, %v508
    %v538 = vpop.permute.xlu0 %537
    %541 = vset.pattern.permute.xlu0 0
    %542 = vperm.xlu0 %541, %v510
    %v543 = vpop.permute.xlu0 %542
    %v545 = vmul.f32 %v538, %v471
    %v546 = vmul.f32 %v543, %v475
    %548 = vset.pattern.permute.xlu0 1
    %549 = vperm.xlu0 %548, %v532
    %v550 = vpop.permute.xlu0 %549
    %553 = vset.pattern.permute.xlu0 1
    %554 = vperm.xlu0 %553, %v534
    %v555 = vpop.permute.xlu0 %554
    %v557 = vmul.f32 %v550, %v473
    %v558 = vmul.f32 %v555, %v477
    %v559 = vadd.f32 %v545, %v557
    %v560 = vadd.f32 %v546, %v558
    %v561 = vlaneseq
    %v562 = vshrl.u32 %v561, 7
    %v563 = vsub.s32 2, %v562
    %v564 = vrot.slane %v482, %v563
    %v565 = vadd.f32 %v559, %v564
    %v566 = vadd.f32 %v560, %v564
    %v567 = vmax.f32 %v565, 0.0
    %v568 = vmax.f32 %v566, 0.0
    %v569 = vld [vmem:[#allocation10] sm:$0xff]
    %v570 = vld [vmem:[#allocation10 + $0x8] sm:$0xff]
    %v571 = vld [vmem:[#allocation10 + $0x10] sm:$0xff]
    %v572 = vld [vmem:[#allocation10 + $0x18] sm:$0xff]
    %v573 = vld [vmem:[#allocation10 + $0x20] sm:$0xff]
    %v574 = vld [vmem:[#allocation10 + $0x28] sm:$0xff]
    %v575 = vld [vmem:[#allocation10 + $0x30] sm:$0xff]
    %v576 = vld [vmem:[#allocation10 + $0x38] sm:$0xff]
    %v577 = vld [vmem:[#allocation10 + $0x40] sm:$0xff]
    %v578 = vld [vmem:[#allocation10 + $0x48] sm:$0xff]
    %v579 = vld [vmem:[#allocation10 + $0x50] sm:$0xff]
    %v580 = vld [vmem:[#allocation10 + $0x58] sm:$0xff]
    %v581 = vld [vmem:[#allocation10 + $0x60] sm:$0xff]
    %v582 = vld [vmem:[#allocation10 + $0x68] sm:$0xff]
    %v583 = vld [vmem:[#allocation10 + $0x70] sm:$0xff]
    %v584 = vld [vmem:[#allocation10 + $0x78] sm:$0xff]
    %v585 = vld [vmem:[%s7] sm:$0x1]
    %v587 = vlaneseq
    %v588 = vshrl.u32 %v587, 7
    %v589 = vsub.s32 0, %v588
    %v590 = vrot.slane %v585, %v589
    %592 = vmatprep.subr.mxu0 0.0
    %593 = vmatpush1.msra.mxu0 %v569
    %594 = vmatprep.subr.mxu0 0.0
    %595 = vmatpush1.msra.mxu0 %v570
    %596 = vmatprep.subr.mxu0 0.0
    %597 = vmatpush1.msra.mxu0 %v571
    %598 = vmatprep.subr.mxu0 0.0
    %599 = vmatpush1.msra.mxu0 %v572
    %600 = vmatprep.subr.mxu0 0.0
    %601 = vmatpush1.msra.mxu0 %v573
    %602 = vmatprep.subr.mxu0 0.0
    %603 = vmatpush1.msra.mxu0 %v574
    %604 = vmatprep.subr.mxu0 0.0
    %605 = vmatpush1.msra.mxu0 %v575
    %606 = vmatprep.subr.mxu0 0.0
    %607 = vmatpush1.msra.mxu0 %v576
    %608 = vmatprep.subr.mxu0 0.0
    %609 = vmatpush1.msra.mxu0 %v577
    %610 = vmatprep.subr.mxu0 0.0
    %611 = vmatpush1.msra.mxu0 %v578
    %612 = vmatprep.subr.mxu0 0.0
    %613 = vmatpush1.msra.mxu0 %v579
    %614 = vmatprep.subr.mxu0 0.0
    %615 = vmatpush1.msra.mxu0 %v580
    %616 = vmatprep.subr.mxu0 0.0
    %617 = vmatpush1.msra.mxu0 %v581
    %618 = vmatprep.subr.mxu0 0.0
    %619 = vmatpush1.msra.mxu0 %v582
    %620 = vmatprep.subr.mxu0 0.0
    %621 = vmatpush1.msra.mxu0 %v583
    %622 = vmatprep.subr.mxu0 0.0
    %623 = vmatpush1.msra.mxu0 %v584
    %624 = vmatprep.subr.mxu0 0.0
    %625 = vmatpush1.msra.mxu0 0.0
    %626 = vmatprep.subr.mxu0 0.0
    %627 = vmatpush1.msra.mxu0 0.0
    %628 = vmatprep.subr.mxu0 0.0
    %629 = vmatpush1.msra.mxu0 0.0
    %630 = vmatprep.subr.mxu0 0.0
    %631 = vmatpush1.msra.mxu0 0.0
    %632 = vmatprep.subr.mxu0 0.0
    %633 = vmatpush1.msra.mxu0 0.0
    %634 = vmatprep.subr.mxu0 0.0
    %635 = vmatpush1.msra.mxu0 0.0
    %636 = vmatprep.subr.mxu0 0.0
    %637 = vmatpush1.msra.mxu0 0.0
    %638 = vmatprep.subr.mxu0 0.0
    %639 = vmatpush1.msra.mxu0 0.0
    %640 = vmatprep.subr.mxu0 0.0
    %641 = vmatpush1.msra.mxu0 0.0
    %642 = vmatprep.subr.mxu0 0.0
    %643 = vmatpush1.msra.mxu0 0.0
    %644 = vmatprep.subr.mxu0 0.0
    %645 = vmatpush1.msra.mxu0 0.0
    %646 = vmatprep.subr.mxu0 0.0
    %647 = vmatpush1.msra.mxu0 0.0
    %648 = vmatprep.subr.mxu0 0.0
    %649 = vmatpush1.msra.mxu0 0.0
    %650 = vmatprep.subr.mxu0 0.0
    %651 = vmatpush1.msra.mxu0 0.0
    %652 = vmatprep.subr.mxu0 0.0
    %653 = vmatpush1.msra.mxu0 0.0
    %654 = vmatprep.subr.mxu0 0.0
    %655 = vmatpush1.msra.mxu0 0.0
    %656 = vmatprep.mubr.f32.mxu0 0.0
    %657 = vmatmul.mubr.f32.gmra.mrb[0].mxu0 %v567
    %v658 = vpop.f32.mrb[0].mxu0
    %v659 = vadd.f32 %v590, %v658
    %v660 = vpop.f32.mrb[0].mxu0
    %661 = vmatprep.mubr.f32.mxu0 0.0
    %662 = vmatmul.mubr.f32.gmra.mrb[0].mxu0 %v568
    %v663 = vpop.f32.mrb[0].mxu0
    %v664 = vadd.f32 %v590, %v663
    %v665 = vpop.f32.mrb[0].mxu0
    %666 = vdwg.mxu0
    %v667 = vpack.c.bf16 %v664, %v659
    %v669 = vunpack.c.l.b16 %v667
    %v670 = vunpack.c.h.b16 %v667
    %v671 = vpack.c.b16 %v669, %v669
    %v672 = vpack.c.b16 %v670, %v670
    %675 = vst [vmem:[#allocation11] sm:$0xf] %v671
    %676 = vst [vmem:[#allocation11 + $0x4] sm:$0xf] %v672
    // Predicated region
    $region54: #{tpu_custom_call.1} parent=1 // pred_check
      _
    $region55: #{tpu_custom_call.1} parent=1 // pred_check_branch
      %678 = sbr.rel (0) target = $region57
    $region56: #{tpu_custom_call.1} parent=1 // pred_region
      %s680 = ssub.s32 128, 128
      %681 = vsyncadd [#allocation4], %s680
      %s682 = sshll.u32 [#allocation11], 4
      %s683 = int_to_ptr.vmem [resolvable:$true] %s682
      %688 = dma.vmem_to_hbm [thread:$0]  %s683, 128, %s8, [#allocation4], 64, 64, 4
    $region57: #{tpu_custom_call.1} parent=1 // pred_fallthru
      _
    // Predicated region
    $region58: #{tpu_custom_call.1} parent=1 // pred_check
      _
    $region59: #{tpu_custom_call.1} parent=1 // pred_check_branch
      %690 = sbr.rel (0) target = $region61
    $region60: #{tpu_custom_call.1} parent=1 // pred_region
      %691 = dma.done [#allocation4], 128
    $region61: #{tpu_custom_call.1} parent=1 // pred_fallthru
      _
    %692 = vsyncpa [#allocation3], 1
    %693 = vsyncpa [#allocation6], 1
    %694 = vsyncpa [#allocation9], 1
    %695 = vsyncpa [#allocation4], 1

</llo_original>
